<compile_context>
chip_gen: v7x
topology: tpu7x:2x2x1
jax: 0.10.0
libtpu: 0.0.40
codegen_flags: <defaults>
</compile_context>

<pallas_src>
import numpy as np
import jax
import jax.numpy as jnp
from jax.experimental import pallas as pl
from jax.experimental.pallas import tpu as pltpu


# ----------------------------------------------------------------------------
# Host-side filter construction (plain numpy; config-time constants)
# ----------------------------------------------------------------------------
def _bilinear_resize_matrix(in_size: int, out_size: int) -> np.ndarray:
    """Dense (out_size, in_size) separable bilinear (antialiased) resize matrix."""
    scale = in_size / out_size
    filterscale = max(scale, 1.0)          # widen filter support when downscaling
    support = 1.0 * filterscale            # bilinear filter support = 1
    mat = np.zeros((out_size, in_size), dtype=np.float32)
    for i in range(out_size):
        center = (i + 0.5) * scale
        lo = int(np.floor(center - support))
        hi = int(np.ceil(center + support))
        for j in range(lo, hi + 1):
            x = (j + 0.5 - center) / filterscale
            w = max(0.0, 1.0 - abs(x))
            if w <= 0.0:
                continue
            jj = min(max(j, 0), in_size - 1)   # clip window at image border
            mat[i, jj] += w
        s = mat[i].sum()
        if s > 0:
            mat[i] /= s
    return mat


# ----------------------------------------------------------------------------
# Pallas kernel:  out[c] = (Rh @ ((u8->bf16 img)[c] @ RwT)) * scale_c + bias_c
# ----------------------------------------------------------------------------
def _make_kernel(C, H_in, scales, biases):
    def kernel(img_ref, rh_ref, rwt_ref, out_ref):
        # img_ref : (C*H_in, W_in)    uint8   (channels stacked along rows)
        # rh_ref  : (H_out, H_in)     bf16
        # rwt_ref : (W_in, W_out)     bf16    (pre-transposed on host)
        # out_ref : (C, H_out, W_out) f32
        # u8 -> f32 -> bf16 on the VPU (0..255 integers are exact in bf16).
        x = img_ref[...].astype(jnp.float32).astype(jnp.bfloat16)
        # W contraction with all channels fused into the M dim -> one big,
        # lane-dense MXU matmul, f32 accumulation.
        t = jnp.dot(x, rwt_ref[...], preferred_element_type=jnp.float32)
        t = t.astype(jnp.bfloat16)                       # (C*H_in, W_out)
        rh = rh_ref[...]                                 # (H_out, H_in), loaded once
        for c in range(C):                               # static unroll, C is tiny
            tc = t[c * H_in:(c + 1) * H_in, :]           # (H_in, W_out) static slice
            res = jnp.dot(rh, tc, preferred_element_type=jnp.float32)
            # ToTensor (1/255) + Normalize folded into one f32 affine (constants).
            out_ref[c, :, :] = res * scales[c] + biases[c]
    return kernel


def visual_transform(x_hwc_u8, img_size, mean, std):
    """JAX/Pallas equivalent of VisualTransform.forward for an HWC uint8 image.

    Returns a (C, img_size, img_size) float32 array (CHW, ToTensor+Normalize).
    """
    H_in, W_in, C = x_hwc_u8.shape

    # Keep the image uint8: HWC -> (C*H_in, W_in) is a cheap byte relayout (no
    # f32 materialization in HBM); the float cast happens inside the kernel.
    img = jnp.transpose(x_hwc_u8, (2, 0, 1)).reshape(C * H_in, W_in)

    # Resize matrices in bf16 (filter weights need ~8 bits; pixels exact in bf16).
    # TODO(synk): for strongly anisotropic resizes, pick the contraction order
    #             (H-first vs W-first) on the host to minimize MACs.
    rh = jnp.asarray(_bilinear_resize_matrix(H_in, img_size), dtype=jnp.bfloat16)
    rwt = jnp.asarray(
        np.ascontiguousarray(_bilinear_resize_matrix(W_in, img_size).T),
        dtype=jnp.bfloat16)                                     # (W_in, W_out)

    mean_np = np.asarray(mean, dtype=np.float64)
    std_np = np.asarray(std, dtype=np.float64)
    # (x/255 - mean) / std  ==  x * scale + bias   (baked-in f32 constants)
    scales = tuple(float(v) for v in (1.0 / (255.0 * std_np)))
    biases = tuple(float(v) for v in (-mean_np / std_np))

    kernel = _make_kernel(C, H_in, scales, biases)

    out = pl.pallas_call(
        kernel,
        out_shape=jax.ShapeDtypeStruct((C, img_size, img_size), jnp.float32),
        grid_spec=pltpu.PrefetchScalarGridSpec(
            num_scalar_prefetch=0,
            grid=(1,),                      # single fused invocation
            in_specs=[
                pl.BlockSpec((C * H_in, W_in), lambda i: (0, 0)),       # img (u8)
                pl.BlockSpec((img_size, H_in), lambda i: (0, 0)),       # Rh  (bf16)
                pl.BlockSpec((W_in, img_size), lambda i: (0, 0)),       # RwT (bf16)
            ],
            out_specs=pl.BlockSpec((C, img_size, img_size),
                                   lambda i: (0, 0, 0)),
        ),
        compiler_params=pltpu.CompilerParams(
            dimension_semantics=("arbitrary",)),
    )(img, rh, rwt)
    return out


# ----------------------------------------------------------------------------
# Demo / correctness check
# ----------------------------------------------------------------------------
if __name__ == "__main__":
    key = jax.random.PRNGKey(0)
    H_in, W_in, C = 16, 16, 3
    img_size = 8                                   # config.DATA.IN_SIZE
    mean = [0.485, 0.456, 0.406]                   # config.DATA.NORMALIZE.MEAN
    std = [0.229, 0.224, 0.225]                    # config.DATA.NORMALIZE.STD

    x = jax.random.randint(key, (H_in, W_in, C), 0, 256,
                           dtype=jnp.int32).astype(jnp.uint8)

    out = visual_transform(x, img_size, mean, std)
    out = jax.block_until_ready(out)

    # Pure-JAX f32 reference of the same math (resize matmuls + affine).
    rh_f = jnp.asarray(_bilinear_resize_matrix(H_in, img_size))
    rw_f = jnp.asarray(_bilinear_resize_matrix(W_in, img_size))
    img_chw = jnp.transpose(x, (2, 0, 1)).astype(jnp.float32)
    resized = jnp.einsum("oh,chw->cow", rh_f, img_chw)
    resized = jnp.einsum("cow,pw->cop", resized, rw_f)
    mean_a = jnp.asarray(mean, jnp.float32)[:, None, None]
    std_a = jnp.asarray(std, jnp.float32)[:, None, None]
    ref = (resized / 255.0 - mean_a) / std_a

    assert out.shape == (C, img_size, img_size)
    assert out.dtype == jnp.float32
    # bf16 matmuls (f32 accumulate) vs f32 reference: ~0.5 ULP of bf16 at pixel
    # scale -> < 1e-2 after normalization; use a 2e-2 absolute tolerance.
    np.testing.assert_allclose(np.asarray(out), np.asarray(ref),
                               rtol=0.0, atol=2e-2)
    print("KERNEL_OK")
</pallas_src>

<mosaic_0001>
module attributes {stable_mosaic.version = 11 : i64} {
  func.func @kernel(%arg0: i32, %arg1: memref<48x16xi8, #tpu.memory_space<vmem>>, %arg2: memref<8x16xbf16, #tpu.memory_space<vmem>>, %arg3: memref<16x8xbf16, #tpu.memory_space<vmem>>, %arg4: memref<3x8x8xf32, #tpu.memory_space<vmem>>) attributes {dimension_semantics = [#tpu.dimension_semantics<arbitrary>], iteration_bounds = array<i64: 1>, scalar_prefetch = 0 : i64, scratch_operands = 0 : i64, tpu.core_type = #tpu.core_type<tc>, window_params = [{pipeline_mode = #tpu.pipeline_mode<synchronous>, transform_indices = @transform_0, window_bounds = array<i64: 48, 16>}, {pipeline_mode = #tpu.pipeline_mode<synchronous>, transform_indices = @transform_1, window_bounds = array<i64: 8, 16>}, {pipeline_mode = #tpu.pipeline_mode<synchronous>, transform_indices = @transform_2, window_bounds = array<i64: 16, 8>}, {pipeline_mode = #tpu.pipeline_mode<synchronous>, transform_indices = @transform_3, window_bounds = array<i64: 3, 8, 8>}]} {
    %c0 = arith.constant 0 : index
    %c0_0 = arith.constant 0 : index
    %0 = vector.load %arg1[%c0, %c0_0] : memref<48x16xi8, #tpu.memory_space<vmem>>, vector<48x16xi8>
    %1 = arith.uitofp %0 : vector<48x16xi8> to vector<48x16xf32>
    %2 = arith.truncf %1 : vector<48x16xf32> to vector<48x16xbf16>
    %c0_1 = arith.constant 0 : index
    %c0_2 = arith.constant 0 : index
    %3 = vector.load %arg3[%c0_1, %c0_2] : memref<16x8xbf16, #tpu.memory_space<vmem>>, vector<16x8xbf16>
    %cst = arith.constant dense<0.000000e+00> : vector<48x8xf32>
    %4 = tpu.matmul %2, %3, %cst {dimension_numbers = #tpu.dot_dimension_numbers<[1], [0], [0], [1], [0, 0, 1, 1], [], []>} : vector<48x16xbf16>, vector<16x8xbf16>, vector<48x8xf32> -> vector<48x8xf32>
    %5 = arith.truncf %4 : vector<48x8xf32> to vector<48x8xbf16>
    %c0_3 = arith.constant 0 : index
    %c0_4 = arith.constant 0 : index
    %6 = vector.load %arg2[%c0_3, %c0_4] : memref<8x16xbf16, #tpu.memory_space<vmem>>, vector<8x16xbf16>
    %7 = vector.extract_strided_slice %5 {offsets = [0, 0], sizes = [16, 8], strides = [1, 1]} : vector<48x8xbf16> to vector<16x8xbf16>
    %cst_5 = arith.constant dense<0.000000e+00> : vector<8x8xf32>
    %8 = tpu.matmul %6, %7, %cst_5 {dimension_numbers = #tpu.dot_dimension_numbers<[1], [0], [0], [1], [0, 0, 1, 1], [], []>} : vector<8x16xbf16>, vector<16x8xbf16>, vector<8x8xf32> -> vector<8x8xf32>
    %cst_6 = arith.constant 0.0171247534 : f32
    %9 = vector.broadcast %cst_6 : f32 to vector<8x8xf32>
    %10 = arith.mulf %8, %9 : vector<8x8xf32>
    %cst_7 = arith.constant -2.11790395 : f32
    %11 = vector.broadcast %cst_7 : f32 to vector<8x8xf32>
    %12 = arith.addf %10, %11 : vector<8x8xf32>
    %c0_8 = arith.constant 0 : index
    %c0_9 = arith.constant 0 : index
    %c0_10 = arith.constant 0 : index
    %13 = vector.load %arg4[%c0_8, %c0_9, %c0_10] : memref<3x8x8xf32, #tpu.memory_space<vmem>>, vector<1x8x8xf32>
    %14 = vector.shape_cast %13 : vector<1x8x8xf32> to vector<8x8xf32>
    %15 = vector.shape_cast %12 : vector<8x8xf32> to vector<1x8x8xf32>
    tpu.vector_store %arg4[%c0_8, %c0_9, %c0_10], %15 {strides = array<i32>} : memref<3x8x8xf32, #tpu.memory_space<vmem>>, vector<1x8x8xf32>,
    %16 = vector.extract_strided_slice %5 {offsets = [16, 0], sizes = [16, 8], strides = [1, 1]} : vector<48x8xbf16> to vector<16x8xbf16>
    %cst_11 = arith.constant dense<0.000000e+00> : vector<8x8xf32>
    %17 = tpu.matmul %6, %16, %cst_11 {dimension_numbers = #tpu.dot_dimension_numbers<[1], [0], [0], [1], [0, 0, 1, 1], [], []>} : vector<8x16xbf16>, vector<16x8xbf16>, vector<8x8xf32> -> vector<8x8xf32>
    %cst_12 = arith.constant 0.0175070036 : f32
    %18 = vector.broadcast %cst_12 : f32 to vector<8x8xf32>
    %19 = arith.mulf %17, %18 : vector<8x8xf32>
    %cst_13 = arith.constant -2.03571439 : f32
    %20 = vector.broadcast %cst_13 : f32 to vector<8x8xf32>
    %21 = arith.addf %19, %20 : vector<8x8xf32>
    %c1 = arith.constant 1 : index
    %c0_14 = arith.constant 0 : index
    %c0_15 = arith.constant 0 : index
    %22 = vector.load %arg4[%c1, %c0_14, %c0_15] : memref<3x8x8xf32, #tpu.memory_space<vmem>>, vector<1x8x8xf32>
    %23 = vector.shape_cast %22 : vector<1x8x8xf32> to vector<8x8xf32>
    %24 = vector.shape_cast %21 : vector<8x8xf32> to vector<1x8x8xf32>
    tpu.vector_store %arg4[%c1, %c0_14, %c0_15], %24 {strides = array<i32>} : memref<3x8x8xf32, #tpu.memory_space<vmem>>, vector<1x8x8xf32>,
    %25 = vector.extract_strided_slice %5 {offsets = [32, 0], sizes = [16, 8], strides = [1, 1]} : vector<48x8xbf16> to vector<16x8xbf16>
    %cst_16 = arith.constant dense<0.000000e+00> : vector<8x8xf32>
    %26 = tpu.matmul %6, %25, %cst_16 {dimension_numbers = #tpu.dot_dimension_numbers<[1], [0], [0], [1], [0, 0, 1, 1], [], []>} : vector<8x16xbf16>, vector<16x8xbf16>, vector<8x8xf32> -> vector<8x8xf32>
    %cst_17 = arith.constant 0.0174291935 : f32
    %27 = vector.broadcast %cst_17 : f32 to vector<8x8xf32>
    %28 = arith.mulf %26, %27 : vector<8x8xf32>
    %cst_18 = arith.constant -1.80444443 : f32
    %29 = vector.broadcast %cst_18 : f32 to vector<8x8xf32>
    %30 = arith.addf %28, %29 : vector<8x8xf32>
    %c2 = arith.constant 2 : index
    %c0_19 = arith.constant 0 : index
    %c0_20 = arith.constant 0 : index
    %31 = vector.load %arg4[%c2, %c0_19, %c0_20] : memref<3x8x8xf32, #tpu.memory_space<vmem>>, vector<1x8x8xf32>
    %32 = vector.shape_cast %31 : vector<1x8x8xf32> to vector<8x8xf32>
    %33 = vector.shape_cast %30 : vector<8x8xf32> to vector<1x8x8xf32>
    tpu.vector_store %arg4[%c2, %c0_19, %c0_20], %33 {strides = array<i32>} : memref<3x8x8xf32, #tpu.memory_space<vmem>>, vector<1x8x8xf32>,
    return
  }
  func.func @transform_0(%arg0: i32) -> (i32, i32) {
    %c0_i32 = arith.constant 0 : i32
    %c0_i32_0 = arith.constant 0 : i32
    %c0_i32_1 = arith.constant 0 : i32
    return %c0_i32, %c0_i32_0 : i32, i32
  }
  func.func @transform_1(%arg0: i32) -> (i32, i32) {
    %c0_i32 = arith.constant 0 : i32
    %c0_i32_0 = arith.constant 0 : i32
    %c0_i32_1 = arith.constant 0 : i32
    return %c0_i32, %c0_i32_0 : i32, i32
  }
  func.func @transform_2(%arg0: i32) -> (i32, i32) {
    %c0_i32 = arith.constant 0 : i32
    %c0_i32_0 = arith.constant 0 : i32
    %c0_i32_1 = arith.constant 0 : i32
    return %c0_i32, %c0_i32_0 : i32, i32
  }
  func.func @transform_3(%arg0: i32) -> (i32, i32, i32) {
    %c0_i32 = arith.constant 0 : i32
    %c0_i32_0 = arith.constant 0 : i32
    %c0_i32_1 = arith.constant 0 : i32
    %c0_i32_2 = arith.constant 0 : i32
    return %c0_i32, %c0_i32_0, %c0_i32_1 : i32, i32, i32
  }
}

</mosaic_0001>

<llo_original>
// kernel: tpu_custom_call.1
$region0: #{tpu_custom_call.1}
  #allocation0 [shape = 'u32[]', space=smem, size = 0x4, offset = 0x4, fixed_abs, tag = 'smem constant byte address 0x4 - core index']
  #allocation1 [shape = 'u32[144,128]{1,0:T(1,128)}', space=vmem, size = 0x12000, scoped, tag = 'internal scratch']
  %s0 = inlined_call_operand.vmem [shape: u8[48,16], index: 0, kind: input, shape index: {}]
  %s1 = inlined_call_operand.vmem [shape: bf16[8,16], index: 1, kind: input, shape index: {}]
  %s2 = inlined_call_operand.vmem [shape: bf16[16,8], index: 2, kind: input, shape index: {}]
  %s3 = inlined_call_operand.hbm [shape: f32[3,8,8], index: 3, kind: output, shape index: {}]
  %s4 = sld [smem:[#allocation0]]
  $region22: #{tpu_custom_call.1} parent=0
    _
  %s6 = ssub.s32 1, %s4
  %s7 = scalar_select 0, %s6, %s4
  $region1: #{tpu_custom_call.1} parent=0
    #allocation2 [shape = 'u8[12288]{0}', space=vmem, size = 0x3000, scoped, tag = 'output window, operand 0, single buffered']
    #allocation3 [shape = 's32[1]{0}', space=sflag, size = 0x4, scoped, tag = 'scoped memory for tpu_custom_call.1']
    %8 = vsyncpa [#allocation3], 0
    // Predicated region
    $region2: #{tpu_custom_call.1} parent=1 // pred_check
      _
    $region3: #{tpu_custom_call.1} parent=1 // pred_check_branch
      %10 = sbr.rel (0) target = $region5
    $region4: #{tpu_custom_call.1} parent=1 // pred_region
      _
    $region5: #{tpu_custom_call.1} parent=1 // pred_fallthru
      _
    // Predicated region
    $region6: #{tpu_custom_call.1} parent=1 // pred_check
      _
    $region7: #{tpu_custom_call.1} parent=1 // pred_check_branch
      %12 = sbr.rel (0) target = $region9
    $region8: #{tpu_custom_call.1} parent=1 // pred_region
      _
    $region9: #{tpu_custom_call.1} parent=1 // pred_fallthru
      _
    // Predicated region
    $region10: #{tpu_custom_call.1} parent=1 // pred_check
      _
    $region11: #{tpu_custom_call.1} parent=1 // pred_check_branch
      %14 = sbr.rel (0) target = $region13
    $region12: #{tpu_custom_call.1} parent=1 // pred_region
      _
    $region13: #{tpu_custom_call.1} parent=1 // pred_fallthru
      _
    %v16 = vld [vmem:[%s0] sm:$0x3]
    %v17 = vld [vmem:[%s0 + $0x2] sm:$0x3]
    %v18 = vld [vmem:[%s0 + $0x4] sm:$0x3]
    %v19 = vld [vmem:[%s0 + $0x6] sm:$0x3]
    %v20 = vld [vmem:[%s0 + $0x8] sm:$0x3]
    %v21 = vld [vmem:[%s0 + $0xa] sm:$0x3]
    %v22 = vunpack.c.l.u8.bf16 %v16
    %v23 = vunpack.c.l.u8.bf16 %v17
    %v24 = vunpack.c.l.u8.bf16 %v18
    %v25 = vunpack.c.l.u8.bf16 %v19
    %v26 = vunpack.c.l.u8.bf16 %v20
    %v27 = vunpack.c.l.u8.bf16 %v21
    %v28 = vld [vmem:[%s2] sm:$0xf]
    %v29 = vld [vmem:[%s2 + $0x4] sm:$0xf]
    %v36 = vunpack.c.l.b16 %v22
    %v37 = vunpack.c.l.b16 %v23
    %v38 = vunpack.c.l.b16 %v24
    %v39 = vunpack.c.l.b16 %v25
    %v40 = vunpack.c.l.b16 %v26
    %v41 = vunpack.c.l.b16 %v27
    %v42 = vpack.c.b16 %v37, %v36
    %v43 = vpack.c.b16 %v39, %v38
    %v44 = vpack.c.b16 %v41, %v40
    %v47 = vunpack.c.l.b16 %v28
    %v48 = vunpack.c.l.b16 %v29
    %v49 = vpack.c.b16 %v48, %v47
    %vm51 = vcmask 130048
    %v53 = vsel %vm51, %v42, 0
    %v56 = vsel %vm51, %v43, 0
    %v59 = vsel %vm51, %v44, 0
    %61 = vmatprep.subr.bf16.mxu0 0
    %62 = vmatpush1.bf16.msra.mxu0 %v49
    %63 = vmatprep.subr.bf16.mxu0 0
    %64 = vmatpush1.bf16.msra.mxu0 0
    %65 = vmatprep.subr.bf16.mxu0 0
    %66 = vmatpush1.bf16.msra.mxu0 0
    %67 = vmatprep.subr.bf16.mxu0 0
    %68 = vmatpush1.bf16.msra.mxu0 0
    %69 = vmatprep.subr.bf16.mxu0 0
    %70 = vmatpush1.bf16.msra.mxu0 0
    %71 = vmatprep.subr.bf16.mxu0 0
    %72 = vmatpush1.bf16.msra.mxu0 0
    %73 = vmatprep.subr.bf16.mxu0 0
    %74 = vmatpush1.bf16.msra.mxu0 0
    %75 = vmatprep.subr.bf16.mxu0 0
    %76 = vmatpush1.bf16.msra.mxu0 0
    %77 = vmatprep.subr.bf16.mxu0 0
    %78 = vmatpush1.bf16.msra.mxu0 0
    %79 = vmatprep.subr.bf16.mxu0 0
    %80 = vmatpush1.bf16.msra.mxu0 0
    %81 = vmatprep.subr.bf16.mxu0 0
    %82 = vmatpush1.bf16.msra.mxu0 0
    %83 = vmatprep.subr.bf16.mxu0 0
    %84 = vmatpush1.bf16.msra.mxu0 0
    %85 = vmatprep.subr.bf16.mxu0 0
    %86 = vmatpush1.bf16.msra.mxu0 0
    %87 = vmatprep.subr.bf16.mxu0 0
    %88 = vmatpush1.bf16.msra.mxu0 0
    %89 = vmatprep.subr.bf16.mxu0 0
    %90 = vmatpush1.bf16.msra.mxu0 0
    %91 = vmatprep.subr.bf16.mxu0 0
    %92 = vmatpush1.bf16.msra.mxu0 0
    %93 = vmatprep.mubr.bf16.mxu0 0
    %94 = vmatmul.mubr.bf16.gmra.mrb[0].mxu0 %v53
    %v95 = vpop.f32.mrb[0].mxu0
    %v96 = vadd.f32 0.0, %v95
    %v97 = vpop.f32.mrb[0].mxu0
    %v98 = vpop.f32.mrb[0].mxu0
    %v99 = vadd.f32 0.0, %v98
    %v100 = vpop.f32.mrb[0].mxu0
    %101 = vmatprep.mubr.bf16.mxu0 0
    %102 = vmatmul.mubr.bf16.gmra.mrb[0].mxu0 %v56
    %v103 = vpop.f32.mrb[0].mxu0
    %v104 = vadd.f32 0.0, %v103
    %v105 = vpop.f32.mrb[0].mxu0
    %v106 = vpop.f32.mrb[0].mxu0
    %v107 = vadd.f32 0.0, %v106
    %v108 = vpop.f32.mrb[0].mxu0
    %109 = vmatprep.mubr.bf16.mxu0 0
    %110 = vmatmul.mubr.bf16.gmra.mrb[0].mxu0 %v59
    %v111 = vpop.f32.mrb[0].mxu0
    %v112 = vadd.f32 0.0, %v111
    %v113 = vpop.f32.mrb[0].mxu0
    %v114 = vpop.f32.mrb[0].mxu0
    %v115 = vadd.f32 0.0, %v114
    %v116 = vpop.f32.mrb[0].mxu0
    %117 = vdwg.mxu0
    %v118 = vpack.c.bf16 %v99, %v96
    %v119 = vpack.c.bf16 %v107, %v104
    %v120 = vpack.c.bf16 %v115, %v112
    %v121 = vld [vmem:[%s1] sm:$0xf]
    %v123 = vsel %vm51, %v121, 0
    %125 = vmatprep.subr.bf16.mxu0 0
    %126 = vmatpush1.bf16.msra.mxu0 %v118
    %127 = vmatprep.subr.bf16.mxu0 0
    %128 = vmatpush1.bf16.msra.mxu0 0
    %129 = vmatprep.subr.bf16.mxu0 0
    %130 = vmatpush1.bf16.msra.mxu0 0
    %131 = vmatprep.subr.bf16.mxu0 0
    %132 = vmatpush1.bf16.msra.mxu0 0
    %133 = vmatprep.subr.bf16.mxu0 0
    %134 = vmatpush1.bf16.msra.mxu0 0
    %135 = vmatprep.subr.bf16.mxu0 0
    %136 = vmatpush1.bf16.msra.mxu0 0
    %137 = vmatprep.subr.bf16.mxu0 0
    %138 = vmatpush1.bf16.msra.mxu0 0
    %139 = vmatprep.subr.bf16.mxu0 0
    %140 = vmatpush1.bf16.msra.mxu0 0
    %141 = vmatprep.subr.bf16.mxu0 0
    %142 = vmatpush1.bf16.msra.mxu0 0
    %143 = vmatprep.subr.bf16.mxu0 0
    %144 = vmatpush1.bf16.msra.mxu0 0
    %145 = vmatprep.subr.bf16.mxu0 0
    %146 = vmatpush1.bf16.msra.mxu0 0
    %147 = vmatprep.subr.bf16.mxu0 0
    %148 = vmatpush1.bf16.msra.mxu0 0
    %149 = vmatprep.subr.bf16.mxu0 0
    %150 = vmatpush1.bf16.msra.mxu0 0
    %151 = vmatprep.subr.bf16.mxu0 0
    %152 = vmatpush1.bf16.msra.mxu0 0
    %153 = vmatprep.subr.bf16.mxu0 0
    %154 = vmatpush1.bf16.msra.mxu0 0
    %155 = vmatprep.subr.bf16.mxu0 0
    %156 = vmatpush1.bf16.msra.mxu0 0
    %157 = vmatprep.mubr.bf16.mxu0 0
    %158 = vmatmul.mubr.bf16.gmra.mrb[0].mxu0 %v123
    %v159 = vpop.f32.mrb[0].mxu0
    %v160 = vadd.f32 0.0, %v159
    %v161 = vpop.f32.mrb[0].mxu0
    %v162 = vpop.f32.mrb[0].mxu0
    %v163 = vpop.f32.mrb[0].mxu0
    %164 = vdwg.mxu0
    %v165 = vmul.f32 %v160, 0.017124753
    %v166 = vadd.f32 %v165, -2.117904
    %vm167 = vcmask 64512
    %168 = vst.msk [vmem:[#allocation2] sm:$0xff] %vm167, %v166
    %169 = vmatprep.subr.bf16.mxu0 0
    %170 = vmatpush1.bf16.msra.mxu0 %v119
    %171 = vmatprep.subr.bf16.mxu0 0
    %172 = vmatpush1.bf16.msra.mxu0 0
    %173 = vmatprep.subr.bf16.mxu0 0
    %174 = vmatpush1.bf16.msra.mxu0 0
    %175 = vmatprep.subr.bf16.mxu0 0
    %176 = vmatpush1.bf16.msra.mxu0 0
    %177 = vmatprep.subr.bf16.mxu0 0
    %178 = vmatpush1.bf16.msra.mxu0 0
    %179 = vmatprep.subr.bf16.mxu0 0
    %180 = vmatpush1.bf16.msra.mxu0 0
    %181 = vmatprep.subr.bf16.mxu0 0
    %182 = vmatpush1.bf16.msra.mxu0 0
    %183 = vmatprep.subr.bf16.mxu0 0
    %184 = vmatpush1.bf16.msra.mxu0 0
    %185 = vmatprep.subr.bf16.mxu0 0
    %186 = vmatpush1.bf16.msra.mxu0 0
    %187 = vmatprep.subr.bf16.mxu0 0
    %188 = vmatpush1.bf16.msra.mxu0 0
    %189 = vmatprep.subr.bf16.mxu0 0
    %190 = vmatpush1.bf16.msra.mxu0 0
    %191 = vmatprep.subr.bf16.mxu0 0
    %192 = vmatpush1.bf16.msra.mxu0 0
    %193 = vmatprep.subr.bf16.mxu0 0
    %194 = vmatpush1.bf16.msra.mxu0 0
    %195 = vmatprep.subr.bf16.mxu0 0
    %196 = vmatpush1.bf16.msra.mxu0 0
    %197 = vmatprep.subr.bf16.mxu0 0
    %198 = vmatpush1.bf16.msra.mxu0 0
    %199 = vmatprep.subr.bf16.mxu0 0
    %200 = vmatpush1.bf16.msra.mxu0 0
    %201 = vmatprep.mubr.bf16.mxu0 0
    %202 = vmatmul.mubr.bf16.gmra.mrb[0].mxu0 %v123
    %v203 = vpop.f32.mrb[0].mxu0
    %v204 = vadd.f32 0.0, %v203
    %v205 = vpop.f32.mrb[0].mxu0
    %v206 = vpop.f32.mrb[0].mxu0
    %v207 = vpop.f32.mrb[0].mxu0
    %208 = vdwg.mxu0
    %v209 = vmul.f32 %v204, 0.017507004
    %v210 = vadd.f32 %v209, -2.0357144
    %s211 = scalar_lea.vmem [#allocation2], 8
    %212 = vst.msk [vmem:[%s211] sm:$0xff] %vm167, %v210
    %213 = vmatprep.subr.bf16.mxu0 0
    %214 = vmatpush1.bf16.msra.mxu0 %v120
    %215 = vmatprep.subr.bf16.mxu0 0
    %216 = vmatpush1.bf16.msra.mxu0 0
    %217 = vmatprep.subr.bf16.mxu0 0
    %218 = vmatpush1.bf16.msra.mxu0 0
    %219 = vmatprep.subr.bf16.mxu0 0
    %220 = vmatpush1.bf16.msra.mxu0 0
    %221 = vmatprep.subr.bf16.mxu0 0
    %222 = vmatpush1.bf16.msra.mxu0 0
    %223 = vmatprep.subr.bf16.mxu0 0
    %224 = vmatpush1.bf16.msra.mxu0 0
    %225 = vmatprep.subr.bf16.mxu0 0
    %226 = vmatpush1.bf16.msra.mxu0 0
    %227 = vmatprep.subr.bf16.mxu0 0
    %228 = vmatpush1.bf16.msra.mxu0 0
    %229 = vmatprep.subr.bf16.mxu0 0
    %230 = vmatpush1.bf16.msra.mxu0 0
    %231 = vmatprep.subr.bf16.mxu0 0
    %232 = vmatpush1.bf16.msra.mxu0 0
    %233 = vmatprep.subr.bf16.mxu0 0
    %234 = vmatpush1.bf16.msra.mxu0 0
    %235 = vmatprep.subr.bf16.mxu0 0
    %236 = vmatpush1.bf16.msra.mxu0 0
    %237 = vmatprep.subr.bf16.mxu0 0
    %238 = vmatpush1.bf16.msra.mxu0 0
    %239 = vmatprep.subr.bf16.mxu0 0
    %240 = vmatpush1.bf16.msra.mxu0 0
    %241 = vmatprep.subr.bf16.mxu0 0
    %242 = vmatpush1.bf16.msra.mxu0 0
    %243 = vmatprep.subr.bf16.mxu0 0
    %244 = vmatpush1.bf16.msra.mxu0 0
    %245 = vmatprep.mubr.bf16.mxu0 0
    %246 = vmatmul.mubr.bf16.gmra.mrb[0].mxu0 %v123
    %v247 = vpop.f32.mrb[0].mxu0
    %v248 = vadd.f32 0.0, %v247
    %v249 = vpop.f32.mrb[0].mxu0
    %v250 = vpop.f32.mrb[0].mxu0
    %v251 = vpop.f32.mrb[0].mxu0
    %252 = vdwg.mxu0
    %v253 = vmul.f32 %v248, 0.017429193
    %v254 = vadd.f32 %v253, -1.8044444
    %s255 = scalar_lea.vmem [#allocation2], 16
    %256 = vst.msk [vmem:[%s255] sm:$0xff] %vm167, %v254
    // Predicated region
    $region14: #{tpu_custom_call.1} parent=1 // pred_check
      _
    $region15: #{tpu_custom_call.1} parent=1 // pred_check_branch
      %258 = sbr.rel (0) target = $region17
    $region16: #{tpu_custom_call.1} parent=1 // pred_region
      %s260 = ssub.s32 384, 384
      %261 = vsyncadd [#allocation3], %s260
      %s262 = sshll.u32 [#allocation2], 4
      %s263 = int_to_ptr.vmem [resolvable:$true] %s262
      %268 = dma.vmem_to_hbm [thread:$0]  %s263, 384, %s3, [#allocation3], 128, 128, 8
    $region17: #{tpu_custom_call.1} parent=1 // pred_fallthru
      _
    // Predicated region
    $region18: #{tpu_custom_call.1} parent=1 // pred_check
      _
    $region19: #{tpu_custom_call.1} parent=1 // pred_check_branch
      %270 = sbr.rel (0) target = $region21
    $region20: #{tpu_custom_call.1} parent=1 // pred_region
      %271 = dma.done [#allocation3], 384
    $region21: #{tpu_custom_call.1} parent=1 // pred_fallthru
      _
    %272 = vsyncpa [#allocation3], 1

</llo_original>
